<compile_context>
chip_gen: v5e
topology: v5e:2x2
jax: 0.10.0
libtpu: 0.0.40
codegen_flags: <defaults>
</compile_context>

<pallas_src>
import math

import jax
import jax.numpy as jnp
from jax import lax
from jax.experimental import pallas as pl
from jax.experimental.pallas import tpu as pltpu


def _static_int_pow(x, n):
    """x**n for a static positive int n as a multiply chain (stays on the VPU)."""
    assert n >= 1
    result = None
    base = x
    while n:
        if n & 1:
            result = base if result is None else result * base
        n >>= 1
        if n:
            base = base * base
    return result


_INV_PI = 0.3183098861837907
_PI = 3.141592653589793


def _fast_sin(arg):
    """sin(arg) for moderate |arg| (here |arg| <= num_radial*pi).

    Reduce by pi (q = nearest integer of arg/pi), evaluate a degree-11 odd
    Taylor polynomial on |u| <= pi/2 (abs poly error ~6e-8), restore the sign
    with the parity of q.  Much cheaper than jnp.sin's generic reduction.
    """
    t = arg * _INV_PI
    q = jnp.floor(t + 0.5)
    u = (t - q) * _PI                      # |u| <= pi/2
    u2 = u * u
    s = jnp.float32(-2.5052108385441720e-08)
    s = s * u2 + 2.7557319223985893e-06
    s = s * u2 - 1.9841269841269841e-04
    s = s * u2 + 8.3333333333333333e-03
    s = s * u2 - 1.6666666666666666e-01
    s = u + u * u2 * s                     # sin(u)
    qi = q.astype(jnp.int32)
    return jnp.where((qi & 1) == 0, s, -s)  # (-1)^q * sin(u)


def make_dist_emb(num_radial, cutoff=5.0, envelope_exponent=5,
                  tile_rows=4096, out_dtype=jnp.float32, use_fast_sin=True,
                  return_packed=False):
    """Returns fwd(dist, freq) -> (N, num_radial) computed in a Pallas kernel.

    tile_rows: packed (128-lane) rows per grid step.  4096 keeps pipeline
      buffers + compiler temporaries well under the 48 MiB scoped-VMEM limit set
      below on every generation; tune upward on v6e/v7x if desired.
    out_dtype=jnp.bfloat16 halves HBM write traffic / output pipeline buffers
      (useful on v5e) if downstream consumers accept bf16.
    return_packed=True returns the raw (rows_padded, 128) slab (row-major
      identical to (N_padded, r_pad)) and skips the post-kernel slice copy;
      slice in the consumer instead.
    """
    p = envelope_exponent + 1
    a = -(p + 1) * (p + 2) / 2.0
    b = float(p * (p + 2))
    c = -p * (p + 1) / 2.0
    inv_cutoff = 1.0 / float(cutoff)

    assert 1 <= num_radial <= 128
    # Pad the radial axis to a power of two dividing 128 so the packing factor
    # E = 128 // r_pad is integral (num_radial=8 -> r_pad=8, E=16).
    r_pad = 1
    while r_pad < num_radial:
        r_pad *= 2
    E = 128 // r_pad  # edges packed per 128-lane row

    def kernel(dist_ref, sel_ref, fsel_ref, out_ref):
        # dist_ref: (tr, E)    one edge per lane of the narrow input block
        # sel_ref : (E, 128)   0/1 expansion matrix: sel[e, j] = (j // r_pad == e)
        # fsel_ref: (E, 128)   sel * freq[j % r_pad]  (freq folded into the matmul)
        # out_ref : (tr, 128)  lane j -> edge (row*E + j//r_pad), radial j%r_pad
        x = dist_ref[...] * inv_cutoff                              # (tr, E)

        # Expand each edge across its r_pad lanes on the otherwise-idle MXU.
        # HIGHEST precision so x is not truncated to bf16 (feeds 1/x, x^(p+1)).
        xe = jnp.dot(x, sel_ref[...], preferred_element_type=jnp.float32,
                     precision=lax.Precision.HIGHEST)               # (tr, 128)
        fx = jnp.dot(x, fsel_ref[...], preferred_element_type=jnp.float32,
                     precision=lax.Precision.HIGHEST)               # freq * x

        # 1/x: EUP approximate seed (free slot) + 2 Newton-Raphson steps on the
        # VPU -> ~1-2 ulp, independent of the seed's precision.
        r = pl.reciprocal(xe, approx=True)
        r = r * (2.0 - xe * r)
        inv_x = r * (2.0 - xe * r)

        xp0 = _static_int_pow(xe, p - 1)                            # x^(p-1)
        xp1 = xp0 * xe                                              # x^p
        xp2 = xp1 * xe                                              # x^(p+1)
        env = inv_x + a * xp0 + b * xp1 + c * xp2

        s = _fast_sin(fx) if use_fast_sin else jnp.sin(fx)
        out_ref[...] = (env * s).astype(out_ref.dtype)

    # Static 0/1 expansion matrix (hoisted out of the kernel).
    lane_edge = jnp.arange(128, dtype=jnp.int32) // r_pad           # lane -> edge slot
    sel_const = (lane_edge[None, :] ==
                 jnp.arange(E, dtype=jnp.int32)[:, None]).astype(jnp.float32)  # (E,128)

    def fwd(dist, freq):
        N = dist.shape[0]
        rows_needed = -(-N // E)                                    # cdiv
        # Cap the tile at ceil(rows/2) (rounded to 8 sublanes) so the grid has
        # >= 2 steps whenever possible -> both v7x TensorCores get work.
        half_rows = -(-rows_needed // 2)
        tr = max(8, min(tile_rows, ((half_rows + 7) // 8) * 8))
        rows_padded = ((rows_needed + tr - 1) // tr) * tr
        n_pad = rows_padded * E

        d = dist.astype(jnp.float32)
        d = jnp.pad(d, (0, n_pad - N), constant_values=1.0)         # finite padding
        d = d.reshape(rows_padded, E)

        # freq folded into the expansion matrix (padded radial lanes get 0 ->
        # sin(0)=0 in those lanes, sliced away below).
        f = jnp.pad(freq.astype(jnp.float32), (0, r_pad - num_radial))
        fsel = sel_const * jnp.tile(f, E)[None, :]                  # (E, 128)

        out = pl.pallas_call(
            kernel,
            out_shape=jax.ShapeDtypeStruct((rows_padded, 128), out_dtype),
            grid_spec=pltpu.PrefetchScalarGridSpec(
                num_scalar_prefetch=0,
                grid=(rows_padded // tr,),
                in_specs=[
                    pl.BlockSpec((tr, E), lambda i: (i, 0)),
                    pl.BlockSpec((E, 128), lambda i: (0, 0)),       # constant block
                    pl.BlockSpec((E, 128), lambda i: (0, 0)),       # constant block
                ],
                out_specs=pl.BlockSpec((tr, 128), lambda i: (i, 0)),
            ),
            compiler_params=pltpu.CompilerParams(
                dimension_semantics=("parallel",),
                vmem_limit_bytes=48 * 1024 * 1024,
            ),
        )(d, sel_const, fsel)

        if return_packed:
            # (rows_padded, 128) row-major == (n_pad, r_pad) row-major; consumers
            # that accept the packed slab avoid the slice copy below entirely.
            return out
        # Free reshape (same row-major layout), then drop padded edges/channels.
        # TODO(synk): the [:N, :num_radial] slice is a separate XLA copy around
        # the custom call; prefer return_packed=True when the consumer can slice.
        return out.reshape(n_pad, r_pad)[:N, :num_radial]

    return fwd


def dist_emb_reference(dist, freq, cutoff=5.0, envelope_exponent=5):
    """Plain-JAX reference mirroring the PyTorch forward exactly."""
    p = envelope_exponent + 1
    a = -(p + 1) * (p + 2) / 2.0
    b = float(p * (p + 2))
    c = -p * (p + 1) / 2.0
    x = dist[:, None] / cutoff
    xp0 = x ** (p - 1)
    xp1 = xp0 * x
    xp2 = xp1 * x
    env = 1.0 / x + a * xp0 + b * xp1 + c * xp2
    return env * jnp.sin(freq[None, :] * x)


if __name__ == "__main__":
    num_radial = 8
    cutoff = 5.0
    envelope_exponent = 5
    N = 300  # deliberately NOT a multiple of the packing factor (exercises padding)

    # Deterministic parameter init, matching reset_parameters(): freq = [1..R] * pi
    freq = jnp.arange(1, num_radial + 1, dtype=jnp.float32) * math.pi

    # Deterministic example input: distances in (0.1, cutoff)
    key = jax.random.PRNGKey(0)
    dist = jax.random.uniform(key, (N,), dtype=jnp.float32,
                              minval=0.1, maxval=cutoff)

    fwd = make_dist_emb(num_radial, cutoff=cutoff,
                        envelope_exponent=envelope_exponent)
    out = jax.block_until_ready(fwd(dist, freq))

    ref = dist_emb_reference(dist, freq, cutoff=cutoff,
                             envelope_exponent=envelope_exponent)
    assert out.shape == (N, num_radial), out.shape
    assert jnp.allclose(out, ref, atol=1e-5, rtol=1e-5), "mismatch vs reference"

    print("KERNEL_OK")
</pallas_src>

<mosaic_0001>
module attributes {stable_mosaic.version = 11 : i64} {
  func.func @kernel(%arg0: i32, %arg1: memref<16x16xf32, #tpu.memory_space<vmem>>, %arg2: memref<16x128xf32, #tpu.memory_space<vmem>>, %arg3: memref<16x128xf32, #tpu.memory_space<vmem>>, %arg4: memref<16x128xf32, #tpu.memory_space<vmem>>) attributes {dimension_semantics = [#tpu.dimension_semantics<parallel>], iteration_bounds = array<i64: 2>, scalar_prefetch = 0 : i64, scratch_operands = 0 : i64, tpu.core_type = #tpu.core_type<tc>, window_params = [{transform_indices = @transform_0, window_bounds = array<i64: 16, 16>}, {pipeline_mode = #tpu.pipeline_mode<synchronous>, transform_indices = @transform_1, window_bounds = array<i64: 16, 128>}, {pipeline_mode = #tpu.pipeline_mode<synchronous>, transform_indices = @transform_2, window_bounds = array<i64: 16, 128>}, {transform_indices = @transform_3, window_bounds = array<i64: 16, 128>}]} {
    %c0 = arith.constant 0 : index
    %c0_0 = arith.constant 0 : index
    %0 = vector.load %arg1[%c0, %c0_0] : memref<16x16xf32, #tpu.memory_space<vmem>>, vector<16x16xf32>
    %cst = arith.constant 2.000000e-01 : f32
    %1 = vector.broadcast %cst : f32 to vector<16x16xf32>
    %2 = arith.mulf %0, %1 : vector<16x16xf32>
    %c0_1 = arith.constant 0 : index
    %c0_2 = arith.constant 0 : index
    %3 = vector.load %arg2[%c0_1, %c0_2] : memref<16x128xf32, #tpu.memory_space<vmem>>, vector<16x128xf32>
    %cst_3 = arith.constant dense<0.000000e+00> : vector<16x128xf32>
    %4 = tpu.matmul %2, %3, %cst_3 {dimension_numbers = #tpu.dot_dimension_numbers<[1], [0], [0], [1], [0, 0, 1, 1], [], []>, precision = #tpu.contract_precision<fp32>} : vector<16x16xf32>, vector<16x128xf32>, vector<16x128xf32> -> vector<16x128xf32>
    %c0_4 = arith.constant 0 : index
    %c0_5 = arith.constant 0 : index
    %5 = vector.load %arg3[%c0_4, %c0_5] : memref<16x128xf32, #tpu.memory_space<vmem>>, vector<16x128xf32>
    %cst_6 = arith.constant dense<0.000000e+00> : vector<16x128xf32>
    %6 = tpu.matmul %2, %5, %cst_6 {dimension_numbers = #tpu.dot_dimension_numbers<[1], [0], [0], [1], [0, 0, 1, 1], [], []>, precision = #tpu.contract_precision<fp32>} : vector<16x16xf32>, vector<16x128xf32>, vector<16x128xf32> -> vector<16x128xf32>
    %7 = tpu.reciprocal %4 {approx = true} : vector<16x128xf32> -> vector<16x128xf32>
    %8 = arith.mulf %4, %7 : vector<16x128xf32>
    %cst_7 = arith.constant 2.000000e+00 : f32
    %9 = vector.broadcast %cst_7 : f32 to vector<16x128xf32>
    %10 = arith.subf %9, %8 : vector<16x128xf32>
    %11 = arith.mulf %7, %10 : vector<16x128xf32>
    %12 = arith.mulf %4, %11 : vector<16x128xf32>
    %cst_8 = arith.constant 2.000000e+00 : f32
    %13 = vector.broadcast %cst_8 : f32 to vector<16x128xf32>
    %14 = arith.subf %13, %12 : vector<16x128xf32>
    %15 = arith.mulf %11, %14 : vector<16x128xf32>
    %16 = arith.mulf %4, %4 : vector<16x128xf32>
    %17 = arith.mulf %16, %16 : vector<16x128xf32>
    %18 = arith.mulf %4, %17 : vector<16x128xf32>
    %19 = arith.mulf %18, %4 : vector<16x128xf32>
    %20 = arith.mulf %19, %4 : vector<16x128xf32>
    %cst_9 = arith.constant -2.800000e+01 : f32
    %21 = vector.broadcast %cst_9 : f32 to vector<16x128xf32>
    %22 = arith.mulf %21, %18 : vector<16x128xf32>
    %23 = arith.addf %15, %22 : vector<16x128xf32>
    %cst_10 = arith.constant 4.800000e+01 : f32
    %24 = vector.broadcast %cst_10 : f32 to vector<16x128xf32>
    %25 = arith.mulf %24, %19 : vector<16x128xf32>
    %26 = arith.addf %23, %25 : vector<16x128xf32>
    %cst_11 = arith.constant -2.100000e+01 : f32
    %27 = vector.broadcast %cst_11 : f32 to vector<16x128xf32>
    %28 = arith.mulf %27, %20 : vector<16x128xf32>
    %29 = arith.addf %26, %28 : vector<16x128xf32>
    %cst_12 = arith.constant 0.318309873 : f32
    %30 = vector.broadcast %cst_12 : f32 to vector<16x128xf32>
    %31 = arith.mulf %6, %30 : vector<16x128xf32>
    %cst_13 = arith.constant 5.000000e-01 : f32
    %32 = vector.broadcast %cst_13 : f32 to vector<16x128xf32>
    %33 = arith.addf %31, %32 : vector<16x128xf32>
    %34 = math.floor %33 : vector<16x128xf32>
    %35 = arith.subf %31, %34 : vector<16x128xf32>
    %cst_14 = arith.constant 3.14159274 : f32
    %36 = vector.broadcast %cst_14 : f32 to vector<16x128xf32>
    %37 = arith.mulf %35, %36 : vector<16x128xf32>
    %38 = arith.mulf %37, %37 : vector<16x128xf32>
    %cst_15 = arith.constant -2.50521079E-8 : f32
    %39 = vector.broadcast %cst_15 : f32 to vector<16x128xf32>
    %40 = arith.mulf %39, %38 : vector<16x128xf32>
    %cst_16 = arith.constant 2.75573188E-6 : f32
    %41 = vector.broadcast %cst_16 : f32 to vector<16x128xf32>
    %42 = arith.addf %40, %41 : vector<16x128xf32>
    %43 = arith.mulf %42, %38 : vector<16x128xf32>
    %cst_17 = arith.constant 1.98412701E-4 : f32
    %44 = vector.broadcast %cst_17 : f32 to vector<16x128xf32>
    %45 = arith.subf %43, %44 : vector<16x128xf32>
    %46 = arith.mulf %45, %38 : vector<16x128xf32>
    %cst_18 = arith.constant 0.00833333377 : f32
    %47 = vector.broadcast %cst_18 : f32 to vector<16x128xf32>
    %48 = arith.addf %46, %47 : vector<16x128xf32>
    %49 = arith.mulf %48, %38 : vector<16x128xf32>
    %cst_19 = arith.constant 0.166666672 : f32
    %50 = vector.broadcast %cst_19 : f32 to vector<16x128xf32>
    %51 = arith.subf %49, %50 : vector<16x128xf32>
    %52 = arith.mulf %37, %38 : vector<16x128xf32>
    %53 = arith.mulf %52, %51 : vector<16x128xf32>
    %54 = arith.addf %37, %53 : vector<16x128xf32>
    %55 = arith.fptosi %34 : vector<16x128xf32> to vector<16x128xi32>
    %c1_i32 = arith.constant 1 : i32
    %56 = vector.broadcast %c1_i32 : i32 to vector<16x128xi32>
    %57 = arith.andi %55, %56 : vector<16x128xi32>
    %c0_i32 = arith.constant 0 : i32
    %58 = vector.broadcast %c0_i32 : i32 to vector<16x128xi32>
    %59 = arith.cmpi eq, %57, %58 : vector<16x128xi32>
    %cst_20 = arith.constant 0.000000e+00 : f32
    %60 = vector.broadcast %cst_20 : f32 to vector<16x128xf32>
    %61 = arith.subf %60, %54 : vector<16x128xf32>
    %62 = arith.select %59, %54, %61 : vector<16x128xi1>, vector<16x128xf32>
    %63 = arith.mulf %29, %62 : vector<16x128xf32>
    %c0_21 = arith.constant 0 : index
    %c0_22 = arith.constant 0 : index
    %64 = vector.load %arg4[%c0_21, %c0_22] : memref<16x128xf32, #tpu.memory_space<vmem>>, vector<16x128xf32>
    tpu.vector_store %arg4[%c0_21, %c0_22], %63 {strides = array<i32>} : memref<16x128xf32, #tpu.memory_space<vmem>>, vector<16x128xf32>,
    return
  }
  func.func @transform_0(%arg0: i32) -> (i32, i32) {
    %c0_i32 = arith.constant 0 : i32
    %c0_i32_0 = arith.constant 0 : i32
    return %arg0, %c0_i32 : i32, i32
  }
  func.func @transform_1(%arg0: i32) -> (i32, i32) {
    %c0_i32 = arith.constant 0 : i32
    %c0_i32_0 = arith.constant 0 : i32
    %c0_i32_1 = arith.constant 0 : i32
    return %c0_i32, %c0_i32_0 : i32, i32
  }
  func.func @transform_2(%arg0: i32) -> (i32, i32) {
    %c0_i32 = arith.constant 0 : i32
    %c0_i32_0 = arith.constant 0 : i32
    %c0_i32_1 = arith.constant 0 : i32
    return %c0_i32, %c0_i32_0 : i32, i32
  }
  func.func @transform_3(%arg0: i32) -> (i32, i32) {
    %c0_i32 = arith.constant 0 : i32
    %c0_i32_0 = arith.constant 0 : i32
    return %arg0, %c0_i32 : i32, i32
  }
}

</mosaic_0001>

<llo_original>
// kernel: tpu_custom_call.1
$region0: #{tpu_custom_call.1}
  #allocation0 [shape = 'u32[]', space=smem, size = 0x4, offset = 0x4, fixed_abs, tag = 'smem constant byte address 0x4 - core index']
  #allocation1 [shape = 'u32[72,128]{1,0:T(1,128)}', space=vmem, size = 0x9000, scoped, tag = 'internal scratch']
  %s0 = inlined_call_operand.vmem [shape: f32[32,16], index: 0, kind: input, shape index: {}]
  %s1 = inlined_call_operand.vmem [shape: f32[16,128], index: 1, kind: input, shape index: {}]
  %s2 = inlined_call_operand.vmem [shape: f32[16,128], index: 2, kind: input, shape index: {}]
  %s3 = inlined_call_operand.hbm [shape: f32[32,128], index: 3, kind: output, shape index: {}]
  %s4 = sld [smem:[#allocation0]]
  $region45: #{tpu_custom_call.1} parent=0
    _
  %s6 = ssub.s32 1, %s4
  %s7 = scalar_select 0, %s6, %s4
  $region1: #{tpu_custom_call.1} parent=0
    #allocation2 [shape = 'u8[16384]{0}', space=vmem, size = 0x4000, scoped, tag = 'output window, operand 0']
    #allocation3 [shape = 's32[2]{0}', space=sflag, size = 0x8, scoped, tag = 'scoped memory for tpu_custom_call.1']
    %8 = vsyncpa [#allocation3], 0
    %s9 = scalar_lea.sflag [#allocation3], 1
    %10 = vsyncpa %s9, 0
    loop: start=0, step=1, limit=4
    $region2: #{tpu_custom_call.1} parent=1 // loop_pre_header
      _
    $region3: #{tpu_custom_call.1} parent=1 // loop_header
      %s12 = sphi 0, %s16
      %p13 = scmp.ge.s32.totalorder %s12, 4
      %s22 = sphi 0, %s24
      %s25 = sphi 0, %s22
      %s26 = sphi 0, %s25
      %s42 = sphi 0, %s26
      %s46 = sphi 0, %s46
      %s48 = sphi 0, %s46
      %s49 = sphi 0, %s48
      %s63 = sphi 0, %s49
      %s67 = sphi 0, %s67
      %s69 = sphi 0, %s67
      %s70 = sphi 0, %s69
      %s84 = sphi 0, %s70
      %s90 = sphi 0, %s92
      %s93 = sphi 0, %s90
      %s94 = sphi 0, %s93
      %s110 = sphi 0, %s94
    $region4: #{tpu_custom_call.1} parent=1 // loop_header_branch
      %15 = sbr.rel (%p13) target = $region8
    $region5: #{tpu_custom_call.1} parent=1 // loop_body
      %s17 = ssub.s32 %s12, 1
      %s18 = ssub.s32 %s12, 2
      %s19 = sadd.s32 %s12, 1
      %s20 = ssub.s32 %s12, %s19
      %p21 = scmp.eq.s32.totalorder %s20, 0
      %s23 = sadd.s32 %s22, 1
      %s24 = scalar_select %p21, %s22, %s23
      %p27 = pneg %p21
      %p28 = scmp.eq.s32.totalorder %s12, 1
      %p29 = por %p27, %p28
      %p30 = scmp.ne.s32.totalorder %s22, %s25
      %p31 = scmp.eq.s32.totalorder %s12, 0
      %p32 = por %p30, %p31
      %p33 = scmp.ne.s32.totalorder %s22, %s25
      %p34 = scmp.eq.s32.totalorder %s17, 1
      %p35 = por %p33, %p34
      %p36 = scmp.ne.s32.totalorder %s25, %s26
      %p37 = scmp.eq.s32.totalorder %s17, 0
      %p38 = por %p36, %p37
      %p39 = scmp.ne.s32.totalorder %s25, %s26
      %p40 = scmp.eq.s32.totalorder %s18, 1
      %p41 = por %p39, %p40
      %p43 = scmp.ne.s32.totalorder %s26, %s42
      %p44 = scmp.eq.s32.totalorder %s18, 0
      %p45 = por %p43, %p44
      %s47 = sadd.s32 %s46, 1
      %p50 = scmp.eq.s32.totalorder %s12, 1
      %p51 = scmp.ne.s32.totalorder %s46, %s48
      %p52 = scmp.eq.s32.totalorder %s12, 0
      %p53 = por %p51, %p52
      %p54 = scmp.ne.s32.totalorder %s46, %s48
      %p55 = scmp.eq.s32.totalorder %s17, 1
      %p56 = por %p54, %p55
      %p57 = scmp.ne.s32.totalorder %s48, %s49
      %p58 = scmp.eq.s32.totalorder %s17, 0
      %p59 = por %p57, %p58
      %p60 = scmp.ne.s32.totalorder %s48, %s49
      %p61 = scmp.eq.s32.totalorder %s18, 1
      %p62 = por %p60, %p61
      %p64 = scmp.ne.s32.totalorder %s49, %s63
      %p65 = scmp.eq.s32.totalorder %s18, 0
      %p66 = por %p64, %p65
      %s68 = sadd.s32 %s67, 1
      %p71 = scmp.eq.s32.totalorder %s12, 1
      %p72 = scmp.ne.s32.totalorder %s67, %s69
      %p73 = scmp.eq.s32.totalorder %s12, 0
      %p74 = por %p72, %p73
      %p75 = scmp.ne.s32.totalorder %s67, %s69
      %p76 = scmp.eq.s32.totalorder %s17, 1
      %p77 = por %p75, %p76
      %p78 = scmp.ne.s32.totalorder %s69, %s70
      %p79 = scmp.eq.s32.totalorder %s17, 0
      %p80 = por %p78, %p79
      %p81 = scmp.ne.s32.totalorder %s69, %s70
      %p82 = scmp.eq.s32.totalorder %s18, 1
      %p83 = por %p81, %p82
      %p85 = scmp.ne.s32.totalorder %s70, %s84
      %p86 = scmp.eq.s32.totalorder %s18, 0
      %p87 = por %p85, %p86
      %s88 = ssub.s32 %s12, %s19
      %p89 = scmp.eq.s32.totalorder %s88, 0
      %s91 = sadd.s32 %s90, 1
      %s92 = scalar_select %p89, %s90, %s91
      %p95 = pneg %p89
      %p96 = scmp.eq.s32.totalorder %s12, 1
      %p97 = por %p95, %p96
      %p98 = scmp.ne.s32.totalorder %s90, %s93
      %p99 = scmp.eq.s32.totalorder %s12, 0
      %p100 = por %p98, %p99
      %p101 = scmp.ne.s32.totalorder %s90, %s93
      %p102 = scmp.eq.s32.totalorder %s17, 1
      %p103 = por %p101, %p102
      %p104 = scmp.ne.s32.totalorder %s93, %s94
      %p105 = scmp.eq.s32.totalorder %s17, 0
      %p106 = por %p104, %p105
      %p107 = scmp.ne.s32.totalorder %s93, %s94
      %p108 = scmp.eq.s32.totalorder %s18, 1
      %p109 = por %p107, %p108
      %p111 = scmp.ne.s32.totalorder %s94, %s110
      %p112 = scmp.eq.s32.totalorder %s18, 0
      %p113 = por %p111, %p112
      %p114 = scmp.le.s32.totalorder 1, %s12
      %p115 = scmp.lt.s32.totalorder %s12, 3
      %p116 = pnand %p114, %p115
      %p117 = pneg %p116
      // Predicated region
      $region9: #{tpu_custom_call.1} parent=5 // pred_check
        _
      $region10: #{tpu_custom_call.1} parent=5 // pred_check_branch
        %119 = sbr.rel (%p116) target = $region12
      $region11: #{tpu_custom_call.1} parent=5 // pred_region
        %s120 = ssub.s32 %s12, 1
        // Predicated region
        $region13: #{tpu_custom_call.1} parent=11 // pred_check
          %p121 = pneg %p59
        $region14: #{tpu_custom_call.1} parent=11 // pred_check_branch
          %123 = sbr.rel (%p121) target = $region16
        $region15: #{tpu_custom_call.1} parent=11 // pred_region
          _
        $region16: #{tpu_custom_call.1} parent=11 // pred_fallthru
          _
        // Predicated region
        $region17: #{tpu_custom_call.1} parent=11 // pred_check
          %p124 = pneg %p80
        $region18: #{tpu_custom_call.1} parent=11 // pred_check_branch
          %126 = sbr.rel (%p124) target = $region20
        $region19: #{tpu_custom_call.1} parent=11 // pred_region
          _
        $region20: #{tpu_custom_call.1} parent=11 // pred_fallthru
          _
      $region12: #{tpu_custom_call.1} parent=5 // pred_fallthru
        _
      %p127 = scmp.lt.s32.totalorder %s12, 2
      // Predicated region
      $region21: #{tpu_custom_call.1} parent=5 // pred_check
        %p128 = pneg %p127
      $region22: #{tpu_custom_call.1} parent=5 // pred_check_branch
        %130 = sbr.rel (%p128) target = $region24
      $region23: #{tpu_custom_call.1} parent=5 // pred_region
        // Predicated region
        $region25: #{tpu_custom_call.1} parent=23 // pred_check
          %p131 = pneg %p32
        $region26: #{tpu_custom_call.1} parent=23 // pred_check_branch
          %133 = sbr.rel (%p131) target = $region28
        $region27: #{tpu_custom_call.1} parent=23 // pred_region
          %s134 = smul.u32 2, %s12
          %p135 = scmp.lt.s32.totalorder %s134, 3
          %s136 = scalar_select %p135, %s134, 3
          %s137 = smul.addr %s136, 8
          %s138 = scalar_lea.vmem %s0, %s137
          %s139 = smul.u32 2, %s12
        $region28: #{tpu_custom_call.1} parent=23 // pred_fallthru
          _
      $region24: #{tpu_custom_call.1} parent=5 // pred_fallthru
        _
      %p140 = scmp.le.s32.totalorder 1, %s12
      %p141 = scmp.lt.s32.totalorder %s12, 3
      %p142 = pnand %p140, %p141
      %p143 = pneg %p142
      // Predicated region
      $region29: #{tpu_custom_call.1} parent=5 // pred_check
        _
      $region30: #{tpu_custom_call.1} parent=5 // pred_check_branch
        %145 = sbr.rel (%p142) target = $region32
      $region31: #{tpu_custom_call.1} parent=5 // pred_region
        %s146 = ssub.s32 %s12, 1
        %s147 = smul.u32 2, %s17
        %p148 = scmp.lt.s32.totalorder %s147, 3
        %s149 = scalar_select %p148, %s147, 3
        %s150 = smul.addr %s149, 8
        %s151 = scalar_lea.vmem %s0, %s150
        %p152 = pneg %p38
        %p153 = pneg %p35
        %p154 = pneg %p59
        %p155 = pneg %p56
        %p156 = pneg %p80
        %p157 = pneg %p77
        %p158 = pneg %p106
        %p159 = pneg %p103
        %s160 = sand.u32 %s93, 1
        %s161 = scalar_lea.sflag [#allocation3], %s160
        %s162 = sand.u32 %s93, 1
        %s163 = smul.addr %s162, 16
        %s164 = scalar_lea.vmem [#allocation2], %s163
        %s165 = smul.u32 2, %s17
        %p166 = scmp.lt.s32.totalorder %s165, 3
        %s167 = scalar_select %p166, %s165, 3
        %s168 = smul.addr %s167, 8
        %s169 = scalar_lea.vmem %s0, %s168
        %s170 = smul.u32 2, %s17
        %s171 = smul.u32 2, %s17
        %v172 = vld [vmem:[%s169] sm:$0xff]
        %v173 = vld [vmem:[%s169 + $0x8] sm:$0xff]
        %v174 = vmul.f32 %v172, 0.2
        %v175 = vmul.f32 %v173, 0.2
        %v176 = vld [vmem:[%s1] sm:$0xff]
        %v177 = vld [vmem:[%s1 + $0x8] sm:$0xff]
        %vm178 = vcmask 130048
        %v180 = vsel %vm178, %v174, 0
        %v183 = vsel %vm178, %v175, 0
        %185 = vmatpush.msra.mxu0 0.0
        %186 = vmatpush.msra.mxu0 0.0
        %187 = vmatpush.msra.mxu0 0.0
        %188 = vmatpush.msra.mxu0 0.0
        %189 = vmatpush.msra.mxu0 0.0
        %190 = vmatpush.msra.mxu0 0.0
        %191 = vmatpush.msra.mxu0 0.0
        %192 = vmatpush.msra.mxu0 0.0
        %193 = vmatpush.msra.mxu0 0.0
        %194 = vmatpush.msra.mxu0 0.0
        %195 = vmatpush.msra.mxu0 0.0
        %196 = vmatpush.msra.mxu0 0.0
        %197 = vmatpush.msra.mxu0 0.0
        %198 = vmatpush.msra.mxu0 0.0
        %v199 = vand.u32 %v177, 4294901760
        %200 = vmatpush.msra.mxu0 %v199
        %v201 = vand.u32 %v176, 4294901760
        %202 = vmatpush.msra.mxu0 %v201
        %v203 = vand.u32 %v180, 4294901760
        %v204 = vsub.f32 %v180, %v203
        %v205 = vand.u32 %v204, 4294901760
        %v206 = vsub.f32 %v204, %v205
        %v207 = vand.u32 %v206, 4294901760
        %208 = vmatmul.f32.gmra.mxu0 %v207
        %v209 = vpop.f32.mrf.mxu0
        %v210 = vadd.f32 0.0, %v209
        %v211 = vand.u32 %v183, 4294901760
        %v212 = vsub.f32 %v183, %v211
        %v213 = vand.u32 %v212, 4294901760
        %v214 = vsub.f32 %v212, %v213
        %v215 = vand.u32 %v214, 4294901760
        %216 = vmatmul.f32.gmra.mxu0 %v215
        %v217 = vpop.f32.mrf.mxu0
        %v218 = vadd.f32 0.0, %v217
        %219 = vdwg.mxu0
        %220 = vmatpush.msra.mxu0 0.0
        %221 = vmatpush.msra.mxu0 0.0
        %222 = vmatpush.msra.mxu0 0.0
        %223 = vmatpush.msra.mxu0 0.0
        %224 = vmatpush.msra.mxu0 0.0
        %225 = vmatpush.msra.mxu0 0.0
        %226 = vmatpush.msra.mxu0 0.0
        %227 = vmatpush.msra.mxu0 0.0
        %228 = vmatpush.msra.mxu0 0.0
        %229 = vmatpush.msra.mxu0 0.0
        %230 = vmatpush.msra.mxu0 0.0
        %231 = vmatpush.msra.mxu0 0.0
        %232 = vmatpush.msra.mxu0 0.0
        %233 = vmatpush.msra.mxu0 0.0
        %v234 = vand.u32 %v177, 4294901760
        %v235 = vsub.f32 %v177, %v234
        %v236 = vand.u32 %v235, 4294901760
        %v237 = vsub.f32 %v235, %v236
        %v238 = vand.u32 %v237, 4294901760
        %239 = vmatpush.msra.mxu0 %v238
        %v240 = vand.u32 %v176, 4294901760
        %v241 = vsub.f32 %v176, %v240
        %v242 = vand.u32 %v241, 4294901760
        %v243 = vsub.f32 %v241, %v242
        %v244 = vand.u32 %v243, 4294901760
        %245 = vmatpush.msra.mxu0 %v244
        %v246 = vand.u32 %v180, 4294901760
        %247 = vmatmul.f32.gmra.mxu0 %v246
        %v248 = vpop.f32.mrf.mxu0
        %v249 = vadd.f32 %v210, %v248
        %v250 = vand.u32 %v183, 4294901760
        %251 = vmatmul.f32.gmra.mxu0 %v250
        %v252 = vpop.f32.mrf.mxu0
        %v253 = vadd.f32 %v218, %v252
        %254 = vdwg.mxu0
        %255 = vmatpush.msra.mxu0 0.0
        %256 = vmatpush.msra.mxu0 0.0
        %257 = vmatpush.msra.mxu0 0.0
        %258 = vmatpush.msra.mxu0 0.0
        %259 = vmatpush.msra.mxu0 0.0
        %260 = vmatpush.msra.mxu0 0.0
        %261 = vmatpush.msra.mxu0 0.0
        %262 = vmatpush.msra.mxu0 0.0
        %263 = vmatpush.msra.mxu0 0.0
        %264 = vmatpush.msra.mxu0 0.0
        %265 = vmatpush.msra.mxu0 0.0
        %266 = vmatpush.msra.mxu0 0.0
        %267 = vmatpush.msra.mxu0 0.0
        %268 = vmatpush.msra.mxu0 0.0
        %v269 = vand.u32 %v177, 4294901760
        %v270 = vsub.f32 %v177, %v269
        %271 = vmatpush.msra.mxu0 %v270
        %v272 = vand.u32 %v176, 4294901760
        %v273 = vsub.f32 %v176, %v272
        %274 = vmatpush.msra.mxu0 %v273
        %v275 = vand.u32 %v180, 4294901760
        %v276 = vsub.f32 %v180, %v275
        %277 = vmatmul.f32.gmra.mxu0 %v276
        %v278 = vpop.f32.mrf.mxu0
        %v279 = vadd.f32 %v249, %v278
        %v280 = vand.u32 %v183, 4294901760
        %v281 = vsub.f32 %v183, %v280
        %282 = vmatmul.f32.gmra.mxu0 %v281
        %v283 = vpop.f32.mrf.mxu0
        %v284 = vadd.f32 %v253, %v283
        %285 = vdwg.mxu0
        %286 = vmatpush.msra.mxu0 0.0
        %287 = vmatpush.msra.mxu0 0.0
        %288 = vmatpush.msra.mxu0 0.0
        %289 = vmatpush.msra.mxu0 0.0
        %290 = vmatpush.msra.mxu0 0.0
        %291 = vmatpush.msra.mxu0 0.0
        %292 = vmatpush.msra.mxu0 0.0
        %293 = vmatpush.msra.mxu0 0.0
        %294 = vmatpush.msra.mxu0 0.0
        %295 = vmatpush.msra.mxu0 0.0
        %296 = vmatpush.msra.mxu0 0.0
        %297 = vmatpush.msra.mxu0 0.0
        %298 = vmatpush.msra.mxu0 0.0
        %299 = vmatpush.msra.mxu0 0.0
        %v300 = vand.u32 %v177, 4294901760
        %301 = vmatpush.msra.mxu0 %v300
        %v302 = vand.u32 %v176, 4294901760
        %303 = vmatpush.msra.mxu0 %v302
        %v304 = vand.u32 %v180, 4294901760
        %v305 = vsub.f32 %v180, %v304
        %v306 = vand.u32 %v305, 4294901760
        %307 = vmatmul.f32.gmra.mxu0 %v306
        %v308 = vpop.f32.mrf.mxu0
        %v309 = vadd.f32 %v279, %v308
        %v310 = vand.u32 %v183, 4294901760
        %v311 = vsub.f32 %v183, %v310
        %v312 = vand.u32 %v311, 4294901760
        %313 = vmatmul.f32.gmra.mxu0 %v312
        %v314 = vpop.f32.mrf.mxu0
        %v315 = vadd.f32 %v284, %v314
        %316 = vdwg.mxu0
        %317 = vmatpush.msra.mxu0 0.0
        %318 = vmatpush.msra.mxu0 0.0
        %319 = vmatpush.msra.mxu0 0.0
        %320 = vmatpush.msra.mxu0 0.0
        %321 = vmatpush.msra.mxu0 0.0
        %322 = vmatpush.msra.mxu0 0.0
        %323 = vmatpush.msra.mxu0 0.0
        %324 = vmatpush.msra.mxu0 0.0
        %325 = vmatpush.msra.mxu0 0.0
        %326 = vmatpush.msra.mxu0 0.0
        %327 = vmatpush.msra.mxu0 0.0
        %328 = vmatpush.msra.mxu0 0.0
        %329 = vmatpush.msra.mxu0 0.0
        %330 = vmatpush.msra.mxu0 0.0
        %v331 = vand.u32 %v177, 4294901760
        %v332 = vsub.f32 %v177, %v331
        %v333 = vand.u32 %v332, 4294901760
        %334 = vmatpush.msra.mxu0 %v333
        %v335 = vand.u32 %v176, 4294901760
        %v336 = vsub.f32 %v176, %v335
        %v337 = vand.u32 %v336, 4294901760
        %338 = vmatpush.msra.mxu0 %v337
        %v339 = vand.u32 %v180, 4294901760
        %340 = vmatmul.f32.gmra.mxu0 %v339
        %v341 = vpop.f32.mrf.mxu0
        %v342 = vadd.f32 %v309, %v341
        %v343 = vand.u32 %v183, 4294901760
        %344 = vmatmul.f32.gmra.mxu0 %v343
        %v345 = vpop.f32.mrf.mxu0
        %v346 = vadd.f32 %v315, %v345
        %347 = vdwg.mxu0
        %348 = vmatpush.msra.mxu0 0.0
        %349 = vmatpush.msra.mxu0 0.0
        %350 = vmatpush.msra.mxu0 0.0
        %351 = vmatpush.msra.mxu0 0.0
        %352 = vmatpush.msra.mxu0 0.0
        %353 = vmatpush.msra.mxu0 0.0
        %354 = vmatpush.msra.mxu0 0.0
        %355 = vmatpush.msra.mxu0 0.0
        %356 = vmatpush.msra.mxu0 0.0
        %357 = vmatpush.msra.mxu0 0.0
        %358 = vmatpush.msra.mxu0 0.0
        %359 = vmatpush.msra.mxu0 0.0
        %360 = vmatpush.msra.mxu0 0.0
        %361 = vmatpush.msra.mxu0 0.0
        %v362 = vand.u32 %v177, 4294901760
        %363 = vmatpush.msra.mxu0 %v362
        %v364 = vand.u32 %v176, 4294901760
        %365 = vmatpush.msra.mxu0 %v364
        %v366 = vand.u32 %v180, 4294901760
        %367 = vmatmul.f32.gmra.mxu0 %v366
        %v368 = vpop.f32.mrf.mxu0
        %v369 = vadd.f32 %v342, %v368
        %v370 = vand.u32 %v183, 4294901760
        %371 = vmatmul.f32.gmra.mxu0 %v370
        %v372 = vpop.f32.mrf.mxu0
        %v373 = vadd.f32 %v346, %v372
        %374 = vdwg.mxu0
        %v375 = vld [vmem:[%s2] sm:$0xff]
        %v376 = vld [vmem:[%s2 + $0x8] sm:$0xff]
        %377 = vmatpush.msra.mxu0 0.0
        %378 = vmatpush.msra.mxu0 0.0
        %379 = vmatpush.msra.mxu0 0.0
        %380 = vmatpush.msra.mxu0 0.0
        %381 = vmatpush.msra.mxu0 0.0
        %382 = vmatpush.msra.mxu0 0.0
        %383 = vmatpush.msra.mxu0 0.0
        %384 = vmatpush.msra.mxu0 0.0
        %385 = vmatpush.msra.mxu0 0.0
        %386 = vmatpush.msra.mxu0 0.0
        %387 = vmatpush.msra.mxu0 0.0
        %388 = vmatpush.msra.mxu0 0.0
        %389 = vmatpush.msra.mxu0 0.0
        %390 = vmatpush.msra.mxu0 0.0
        %v391 = vand.u32 %v376, 4294901760
        %392 = vmatpush.msra.mxu0 %v391
        %v393 = vand.u32 %v375, 4294901760
        %394 = vmatpush.msra.mxu0 %v393
        %v395 = vand.u32 %v180, 4294901760
        %v396 = vsub.f32 %v180, %v395
        %v397 = vand.u32 %v396, 4294901760
        %v398 = vsub.f32 %v396, %v397
        %v399 = vand.u32 %v398, 4294901760
        %400 = vmatmul.f32.gmra.mxu0 %v399
        %v401 = vpop.f32.mrf.mxu0
        %v402 = vadd.f32 0.0, %v401
        %v403 = vand.u32 %v183, 4294901760
        %v404 = vsub.f32 %v183, %v403
        %v405 = vand.u32 %v404, 4294901760
        %v406 = vsub.f32 %v404, %v405
        %v407 = vand.u32 %v406, 4294901760
        %408 = vmatmul.f32.gmra.mxu0 %v407
        %v409 = vpop.f32.mrf.mxu0
        %v410 = vadd.f32 0.0, %v409
        %411 = vdwg.mxu0
        %412 = vmatpush.msra.mxu0 0.0
        %413 = vmatpush.msra.mxu0 0.0
        %414 = vmatpush.msra.mxu0 0.0
        %415 = vmatpush.msra.mxu0 0.0
        %416 = vmatpush.msra.mxu0 0.0
        %417 = vmatpush.msra.mxu0 0.0
        %418 = vmatpush.msra.mxu0 0.0
        %419 = vmatpush.msra.mxu0 0.0
        %420 = vmatpush.msra.mxu0 0.0
        %421 = vmatpush.msra.mxu0 0.0
        %422 = vmatpush.msra.mxu0 0.0
        %423 = vmatpush.msra.mxu0 0.0
        %424 = vmatpush.msra.mxu0 0.0
        %425 = vmatpush.msra.mxu0 0.0
        %v426 = vand.u32 %v376, 4294901760
        %v427 = vsub.f32 %v376, %v426
        %v428 = vand.u32 %v427, 4294901760
        %v429 = vsub.f32 %v427, %v428
        %v430 = vand.u32 %v429, 4294901760
        %431 = vmatpush.msra.mxu0 %v430
        %v432 = vand.u32 %v375, 4294901760
        %v433 = vsub.f32 %v375, %v432
        %v434 = vand.u32 %v433, 4294901760
        %v435 = vsub.f32 %v433, %v434
        %v436 = vand.u32 %v435, 4294901760
        %437 = vmatpush.msra.mxu0 %v436
        %v438 = vand.u32 %v180, 4294901760
        %439 = vmatmul.f32.gmra.mxu0 %v438
        %v440 = vpop.f32.mrf.mxu0
        %v441 = vadd.f32 %v402, %v440
        %v442 = vand.u32 %v183, 4294901760
        %443 = vmatmul.f32.gmra.mxu0 %v442
        %v444 = vpop.f32.mrf.mxu0
        %v445 = vadd.f32 %v410, %v444
        %446 = vdwg.mxu0
        %447 = vmatpush.msra.mxu0 0.0
        %448 = vmatpush.msra.mxu0 0.0
        %449 = vmatpush.msra.mxu0 0.0
        %450 = vmatpush.msra.mxu0 0.0
        %451 = vmatpush.msra.mxu0 0.0
        %452 = vmatpush.msra.mxu0 0.0
        %453 = vmatpush.msra.mxu0 0.0
        %454 = vmatpush.msra.mxu0 0.0
        %455 = vmatpush.msra.mxu0 0.0
        %456 = vmatpush.msra.mxu0 0.0
        %457 = vmatpush.msra.mxu0 0.0
        %458 = vmatpush.msra.mxu0 0.0
        %459 = vmatpush.msra.mxu0 0.0
        %460 = vmatpush.msra.mxu0 0.0
        %v461 = vand.u32 %v376, 4294901760
        %v462 = vsub.f32 %v376, %v461
        %463 = vmatpush.msra.mxu0 %v462
        %v464 = vand.u32 %v375, 4294901760
        %v465 = vsub.f32 %v375, %v464
        %466 = vmatpush.msra.mxu0 %v465
        %v467 = vand.u32 %v180, 4294901760
        %v468 = vsub.f32 %v180, %v467
        %469 = vmatmul.f32.gmra.mxu0 %v468
        %v470 = vpop.f32.mrf.mxu0
        %v471 = vadd.f32 %v441, %v470
        %v472 = vand.u32 %v183, 4294901760
        %v473 = vsub.f32 %v183, %v472
        %474 = vmatmul.f32.gmra.mxu0 %v473
        %v475 = vpop.f32.mrf.mxu0
        %v476 = vadd.f32 %v445, %v475
        %477 = vdwg.mxu0
        %478 = vmatpush.msra.mxu0 0.0
        %479 = vmatpush.msra.mxu0 0.0
        %480 = vmatpush.msra.mxu0 0.0
        %481 = vmatpush.msra.mxu0 0.0
        %482 = vmatpush.msra.mxu0 0.0
        %483 = vmatpush.msra.mxu0 0.0
        %484 = vmatpush.msra.mxu0 0.0
        %485 = vmatpush.msra.mxu0 0.0
        %486 = vmatpush.msra.mxu0 0.0
        %487 = vmatpush.msra.mxu0 0.0
        %488 = vmatpush.msra.mxu0 0.0
        %489 = vmatpush.msra.mxu0 0.0
        %490 = vmatpush.msra.mxu0 0.0
        %491 = vmatpush.msra.mxu0 0.0
        %v492 = vand.u32 %v376, 4294901760
        %493 = vmatpush.msra.mxu0 %v492
        %v494 = vand.u32 %v375, 4294901760
        %495 = vmatpush.msra.mxu0 %v494
        %v496 = vand.u32 %v180, 4294901760
        %v497 = vsub.f32 %v180, %v496
        %v498 = vand.u32 %v497, 4294901760
        %499 = vmatmul.f32.gmra.mxu0 %v498
        %v500 = vpop.f32.mrf.mxu0
        %v501 = vadd.f32 %v471, %v500
        %v502 = vand.u32 %v183, 4294901760
        %v503 = vsub.f32 %v183, %v502
        %v504 = vand.u32 %v503, 4294901760
        %505 = vmatmul.f32.gmra.mxu0 %v504
        %v506 = vpop.f32.mrf.mxu0
        %v507 = vadd.f32 %v476, %v506
        %508 = vdwg.mxu0
        %509 = vmatpush.msra.mxu0 0.0
        %510 = vmatpush.msra.mxu0 0.0
        %511 = vmatpush.msra.mxu0 0.0
        %512 = vmatpush.msra.mxu0 0.0
        %513 = vmatpush.msra.mxu0 0.0
        %514 = vmatpush.msra.mxu0 0.0
        %515 = vmatpush.msra.mxu0 0.0
        %516 = vmatpush.msra.mxu0 0.0
        %517 = vmatpush.msra.mxu0 0.0
        %518 = vmatpush.msra.mxu0 0.0
        %519 = vmatpush.msra.mxu0 0.0
        %520 = vmatpush.msra.mxu0 0.0
        %521 = vmatpush.msra.mxu0 0.0
        %522 = vmatpush.msra.mxu0 0.0
        %v523 = vand.u32 %v376, 4294901760
        %v524 = vsub.f32 %v376, %v523
        %v525 = vand.u32 %v524, 4294901760
        %526 = vmatpush.msra.mxu0 %v525
        %v527 = vand.u32 %v375, 4294901760
        %v528 = vsub.f32 %v375, %v527
        %v529 = vand.u32 %v528, 4294901760
        %530 = vmatpush.msra.mxu0 %v529
        %v531 = vand.u32 %v180, 4294901760
        %532 = vmatmul.f32.gmra.mxu0 %v531
        %v533 = vpop.f32.mrf.mxu0
        %v534 = vadd.f32 %v501, %v533
        %v535 = vand.u32 %v183, 4294901760
        %536 = vmatmul.f32.gmra.mxu0 %v535
        %v537 = vpop.f32.mrf.mxu0
        %v538 = vadd.f32 %v507, %v537
        %539 = vdwg.mxu0
        %540 = vmatpush.msra.mxu0 0.0
        %541 = vmatpush.msra.mxu0 0.0
        %542 = vmatpush.msra.mxu0 0.0
        %543 = vmatpush.msra.mxu0 0.0
        %544 = vmatpush.msra.mxu0 0.0
        %545 = vmatpush.msra.mxu0 0.0
        %546 = vmatpush.msra.mxu0 0.0
        %547 = vmatpush.msra.mxu0 0.0
        %548 = vmatpush.msra.mxu0 0.0
        %549 = vmatpush.msra.mxu0 0.0
        %550 = vmatpush.msra.mxu0 0.0
        %551 = vmatpush.msra.mxu0 0.0
        %552 = vmatpush.msra.mxu0 0.0
        %553 = vmatpush.msra.mxu0 0.0
        %v554 = vand.u32 %v376, 4294901760
        %555 = vmatpush.msra.mxu0 %v554
        %v556 = vand.u32 %v375, 4294901760
        %557 = vmatpush.msra.mxu0 %v556
        %v558 = vand.u32 %v180, 4294901760
        %559 = vmatmul.f32.gmra.mxu0 %v558
        %v560 = vpop.f32.mrf.mxu0
        %v561 = vadd.f32 %v534, %v560
        %v562 = vand.u32 %v183, 4294901760
        %563 = vmatmul.f32.gmra.mxu0 %v562
        %v564 = vpop.f32.mrf.mxu0
        %v565 = vadd.f32 %v538, %v564
        %566 = vdwg.mxu0
        %v567 = vrcp.pop %v369
        %v568 = vrcp.pop %v373
        %v569 = vmul.f32 %v369, %v567
        %v570 = vmul.f32 %v373, %v568
        %v571 = vsub.f32 2.0, %v569
        %v572 = vsub.f32 2.0, %v570
        %v573 = vmul.f32 %v567, %v571
        %v574 = vmul.f32 %v568, %v572
        %v575 = vmul.f32 %v369, %v573
        %v576 = vmul.f32 %v373, %v574
        %v577 = vsub.f32 2.0, %v575
        %v578 = vsub.f32 2.0, %v576
        %v579 = vmul.f32 %v573, %v577
        %v580 = vmul.f32 %v574, %v578
        %v581 = vmul.f32 %v369, %v369
        %v582 = vmul.f32 %v373, %v373
        %v583 = vmul.f32 %v581, %v581
        %v584 = vmul.f32 %v582, %v582
        %v585 = vmul.f32 %v369, %v583
        %v586 = vmul.f32 %v373, %v584
        %v587 = vmul.f32 %v585, %v369
        %v588 = vmul.f32 %v586, %v373
        %v589 = vmul.f32 %v587, %v369
        %v590 = vmul.f32 %v588, %v373
        %v591 = vmul.f32 %v585, -28.0
        %v592 = vmul.f32 %v586, -28.0
        %v593 = vadd.f32 %v579, %v591
        %v594 = vadd.f32 %v580, %v592
        %v595 = vmul.f32 %v587, 48.0
        %v596 = vmul.f32 %v588, 48.0
        %v597 = vadd.f32 %v593, %v595
        %v598 = vadd.f32 %v594, %v596
        %v599 = vmul.f32 %v589, -21.0
        %v600 = vmul.f32 %v590, -21.0
        %v601 = vadd.f32 %v597, %v599
        %v602 = vadd.f32 %v598, %v600
        %v603 = vmul.f32 %v561, 0.31830987
        %v604 = vmul.f32 %v565, 0.31830987
        %v605 = vadd.f32 %v603, 0.5
        %v606 = vadd.f32 %v604, 0.5
        %v607 = vfloor.f32 %v605
        %v608 = vfloor.f32 %v606
        %v609 = vsub.f32 %v603, %v607
        %v610 = vsub.f32 %v604, %v608
        %v611 = vmul.f32 %v609, 3.1415927
        %v612 = vmul.f32 %v610, 3.1415927
        %v613 = vmul.f32 %v611, %v611
        %v614 = vmul.f32 %v612, %v612
        %v615 = vmul.f32 %v613, -2.5052108e-08
        %v616 = vmul.f32 %v614, -2.5052108e-08
        %v617 = vadd.f32 %v615, 2.7557319e-06
        %v618 = vadd.f32 %v616, 2.7557319e-06
        %v619 = vmul.f32 %v617, %v613
        %v620 = vmul.f32 %v618, %v614
        %v621 = vsub.f32 %v619, 0.0001984127
        %v622 = vsub.f32 %v620, 0.0001984127
        %v623 = vmul.f32 %v621, %v613
        %v624 = vmul.f32 %v622, %v614
        %v625 = vadd.f32 %v623, 0.008333334
        %v626 = vadd.f32 %v624, 0.008333334
        %v627 = vmul.f32 %v625, %v613
        %v628 = vmul.f32 %v626, %v614
        %v629 = vsub.f32 %v627, 0.16666667
        %v630 = vsub.f32 %v628, 0.16666667
        %v631 = vmul.f32 %v611, %v613
        %v632 = vmul.f32 %v612, %v614
        %v633 = vmul.f32 %v631, %v629
        %v634 = vmul.f32 %v632, %v630
        %v635 = vadd.f32 %v611, %v633
        %v636 = vadd.f32 %v612, %v634
        %v637 = vcvt.f32.s32.to.zero.pseudo %v607
        %v638 = vcvt.f32.s32.to.zero.pseudo %v608
        %v639 = vand.u32 %v637, 1
        %v640 = vand.u32 %v638, 1
        %vm641 = vcmp.eq.s32.totalorder %v639, 0
        %vm642 = vcmp.eq.s32.totalorder %v640, 0
        %v643 = vsub.f32 0.0, %v635
        %v644 = vsub.f32 0.0, %v636
        %v645 = vsel %vm641, %v635, %v643
        %v646 = vsel %vm642, %v636, %v644
        %v647 = vmul.f32 %v601, %v645
        %v648 = vmul.f32 %v602, %v646
        %649 = vst [vmem:[%s164] sm:$0xff] %v647
        %650 = vst [vmem:[%s164 + $0x8] sm:$0xff] %v648
        %s651 = sand.u32 %s93, 1
        %s652 = scalar_lea.sflag [#allocation3], %s651
        %s653 = sand.u32 %s93, 1
        %s654 = smul.addr %s653, 16
        %s655 = scalar_lea.vmem [#allocation2], %s654
        // Predicated region
        $region33: #{tpu_custom_call.1} parent=31 // pred_check
          %p656 = pneg %p103
        $region34: #{tpu_custom_call.1} parent=31 // pred_check_branch
          %658 = sbr.rel (%p656) target = $region36
        $region35: #{tpu_custom_call.1} parent=31 // pred_region
          %s659 = smul.u32 2, %s17
          %661 = vsyncadd %s652, 0
          %s662 = smul.addr %s659, 8
          %s663 = scalar_lea.hbm %s3, %s662
          %s664 = sshll.u32 %s655, 4
          %s665 = int_to_ptr.vmem [resolvable:$true] %s664
          %s666 = sshll.u32 %s663, 4
          %s667 = int_to_ptr.hbm [resolvable:$true] %s666
          %672 = dma.vmem_to_hbm [thread:$0]  %s665, 256, %s667, %s652, 128, 128, 8
        $region36: #{tpu_custom_call.1} parent=31 // pred_fallthru
          _
      $region32: #{tpu_custom_call.1} parent=5 // pred_fallthru
        _
      %p673 = scmp.le.s32.totalorder 2, %s12
      // Predicated region
      $region37: #{tpu_custom_call.1} parent=5 // pred_check
        %p674 = pneg %p673
      $region38: #{tpu_custom_call.1} parent=5 // pred_check_branch
        %676 = sbr.rel (%p674) target = $region40
      $region39: #{tpu_custom_call.1} parent=5 // pred_region
        %s677 = ssub.s32 %s12, 2
        // Predicated region
        $region41: #{tpu_custom_call.1} parent=39 // pred_check
          %p678 = pneg %p109
        $region42: #{tpu_custom_call.1} parent=39 // pred_check_branch
          %680 = sbr.rel (%p678) target = $region44
        $region43: #{tpu_custom_call.1} parent=39 // pred_region
          %s681 = sand.u32 %s94, 1
          %s682 = scalar_lea.sflag [#allocation3], %s681
          %s683 = sand.u32 %s94, 1
          %s684 = smul.addr %s683, 16
          %s685 = scalar_lea.vmem [#allocation2], %s684
          %687 = dma.done %s682, 256
        $region44: #{tpu_custom_call.1} parent=39 // pred_fallthru
          _
      $region40: #{tpu_custom_call.1} parent=5 // pred_fallthru
        _
    $region6: #{tpu_custom_call.1} parent=1 // loop_footer
      %s16 = sadd.s32 1, %s12
    $region7: #{tpu_custom_call.1} parent=1 // loop_footer_branch
      %11 = sbr.rel target = $region3
    $region8: #{tpu_custom_call.1} parent=1 // loop_exit
      _
    %688 = vsyncpa [#allocation3], 1
    %s689 = scalar_lea.sflag [#allocation3], 1
    %690 = vsyncpa %s689, 1

</llo_original>
